<compile_context>
chip_gen: v5e
topology: v5e:2x2
jax: 0.10.0
libtpu: 0.0.40
codegen_flags: <defaults>
</compile_context>

<pallas_src>
import numpy as np
import jax
import jax.numpy as jnp
from jax.experimental import pallas as pl
from jax.experimental.pallas import tpu as pltpu


def _cam_kernel(x_ref, w1t_ref, b1_ref, w2_ref, b2x2_ref, out_ref, cw_ref):
    # x_ref: (Bt, C, HW) lane-dense block; MLP weights are fully VMEM-resident.
    x = x_ref[...]                                            # (Bt, C, HW)
    hw = x.shape[-1]

    # Global max / avg pooling over the spatial axis (single last-axis reduces).
    mx = jnp.max(x, axis=-1, keepdims=True)                   # (Bt, C, 1)
    av = jnp.sum(x, axis=-1, keepdims=True) * (1.0 / hw)      # (Bt, C, 1)

    # Tiny channel MLP on the VPU, broadcast over the leading Bt axis:
    #   fc1: h[b, k] = sum_c W1[k, c] * p[b, c]   (use W1.T of shape (C, 8))
    w1t = w1t_ref[...][None, :, :]                            # (1, C, 8)
    b1 = b1_ref[...][None, :, :]                              # (1, 1, 8)
    h_max = jnp.maximum(jnp.sum(w1t * mx, axis=1, keepdims=True) + b1, 0.0)   # (Bt, 1, 8)
    h_avg = jnp.maximum(jnp.sum(w1t * av, axis=1, keepdims=True) + b1, 0.0)   # (Bt, 1, 8)

    #   fc2 on both branches, summed: W2 @ (h_max + h_avg) + 2*b2 (precomputed).
    w2 = w2_ref[...][None, :, :]                              # (1, C, 8)
    z = jnp.sum(w2 * (h_max + h_avg), axis=-1, keepdims=True) \
        + b2x2_ref[...][None, :, :]                           # (Bt, C, 1)
    cw = jax.nn.sigmoid(z)                                    # (Bt, C, 1)

    # Per-channel rescale: re-read the ref (nearly free from VMEM) so the full
    # tile does not have to stay live in vregs across the MLP.
    out_ref[...] = x_ref[...] * cw                            # (Bt, C, HW)
    cw_ref[...] = cw                                          # (Bt, C, 1)


def _choose_batch_tile(B, C, HW, itemsize=4, target_bytes=1 << 20, max_bytes=12 << 20):
    """Pick a batch tile: ~1 MiB blocks, <=12 MiB (v7x), >=2 grid steps, divides B."""
    per_batch = C * HW * itemsize
    bt = max(1, target_bytes // per_batch)
    bt = min(bt, max(1, max_bytes // per_batch))
    bt = min(bt, B)
    if B >= 2:
        bt = min(bt, -(-B // 2))  # keep the parallel grid length >= 2 (v7x: 2 TCs)
    while B % bt:
        bt -= 1
    return max(1, bt)


def cam_forward(inputs, params):
    """inputs: (B, C, H, W) float32. Returns (outputs (B,C,H,W), channel_w (B,C,1,1))."""
    B, C, H, W = inputs.shape
    HW = H * W
    x3 = inputs.reshape(B, C, HW)

    Bt = _choose_batch_tile(B, C, HW)
    grid = (B // Bt,)

    tile_bytes = Bt * C * HW * 4
    weight_bytes = (C * 8 + 8 + C * 8 + C) * 4
    # in + out tiles, each double-buffered, plus weights/cw/headroom.
    vmem_limit = 4 * tile_bytes + 4 * Bt * C * 4 + weight_bytes + (2 << 20)
    vmem_limit = int(min(max(vmem_limit, 4 << 20), 64 << 20))

    cost = pl.CostEstimate(
        flops=int(B * (2 * C * HW + 32 * C)),
        transcendentals=int(B * C),
        bytes_accessed=int(2 * B * C * HW * 4 + B * C * 4 + weight_bytes),
    )

    out3, cw3 = pl.pallas_call(
        _cam_kernel,
        out_shape=(
            jax.ShapeDtypeStruct((B, C, HW), jnp.float32),
            jax.ShapeDtypeStruct((B, C, 1), jnp.float32),
        ),
        grid_spec=pltpu.PrefetchScalarGridSpec(
            num_scalar_prefetch=0,
            grid=grid,
            in_specs=[
                pl.BlockSpec((Bt, C, HW), lambda b: (b, 0, 0)),  # x, streamed per batch tile
                pl.BlockSpec((C, 8), lambda b: (0, 0)),          # fc1.weight.T (resident)
                pl.BlockSpec((1, 8), lambda b: (0, 0)),          # fc1.bias
                pl.BlockSpec((C, 8), lambda b: (0, 0)),          # fc2.weight
                pl.BlockSpec((C, 1), lambda b: (0, 0)),          # 2 * fc2.bias (prefolded)
            ],
            out_specs=[
                pl.BlockSpec((Bt, C, HW), lambda b: (b, 0, 0)),
                pl.BlockSpec((Bt, C, 1), lambda b: (b, 0, 0)),
            ],
        ),
        compiler_params=pltpu.CompilerParams(
            dimension_semantics=("parallel",),
            vmem_limit_bytes=vmem_limit,
        ),
        cost_estimate=cost,
    )(x3, params["w1_t"], params["b1"], params["w2"], params["b2x2"])

    return out3.reshape(B, C, H, W), cw3.reshape(B, C, 1, 1)


# ----------------------------- parameter setup --------------------------------
def init_params(key, in_channel):
    """PyTorch-default-style uniform init for Linear(in_channel, 8) and Linear(8, in_channel)."""
    k1, k2, k3, k4 = jax.random.split(key, 4)
    bnd1 = 1.0 / np.sqrt(in_channel)
    bnd2 = 1.0 / np.sqrt(8)
    fc1_w = jax.random.uniform(k1, (8, in_channel), jnp.float32, -bnd1, bnd1)
    fc1_b = jax.random.uniform(k2, (8,), jnp.float32, -bnd1, bnd1)
    fc2_w = jax.random.uniform(k3, (in_channel, 8), jnp.float32, -bnd2, bnd2)
    fc2_b = jax.random.uniform(k4, (in_channel,), jnp.float32, -bnd2, bnd2)
    return dict(
        w1_t=fc1_w.T,                                 # (C, 8)
        b1=fc1_b.reshape(1, 8),                       # (1, 8)
        w2=fc2_w,                                     # (C, 8)
        b2=fc2_b.reshape(in_channel, 1),              # (C, 1)  (reference only)
        b2x2=(2.0 * fc2_b).reshape(in_channel, 1),    # (C, 1)  prefolded 2*b2
    )


# ----------------------------- pure-JAX reference ------------------------------
def reference_cam(inputs, p):
    B, C, H, W = inputs.shape
    maxp = jnp.max(inputs, axis=(2, 3))                       # (B, C)
    avgp = jnp.mean(inputs, axis=(2, 3))                      # (B, C)

    def mlp(v):
        h = jax.nn.relu(jnp.dot(v, p["w1_t"]) + p["b1"][0])   # (B, 8)
        return jnp.dot(h, p["w2"].T) + p["b2"][:, 0]          # (B, C)

    cw = jax.nn.sigmoid(mlp(maxp) + mlp(avgp))                # (B, C)
    outputs = inputs * cw[:, :, None, None]
    return outputs, cw.reshape(B, C, 1, 1)


if __name__ == "__main__":
    B, C, H, W = 2, 4, 16, 16        # in_channel=4, ratio=4
    key = jax.random.PRNGKey(0)
    kx, kp = jax.random.split(key)
    inputs = jax.random.normal(kx, (B, C, H, W), jnp.float32)
    params = init_params(kp, C)

    out, cw = jax.block_until_ready(cam_forward(inputs, params))
    ref_out, ref_cw = reference_cam(inputs, params)

    np.testing.assert_allclose(np.asarray(out), np.asarray(ref_out), rtol=1e-5, atol=1e-5)
    np.testing.assert_allclose(np.asarray(cw), np.asarray(ref_cw), rtol=1e-5, atol=1e-5)
    print("KERNEL_OK")
</pallas_src>

<mosaic_0001>
module attributes {stable_mosaic.version = 11 : i64} {
  func.func @_cam_kernel(%arg0: i32, %arg1: memref<1x4x256xf32, #tpu.memory_space<vmem>>, %arg2: memref<4x8xf32, #tpu.memory_space<vmem>>, %arg3: memref<1x8xf32, #tpu.memory_space<vmem>>, %arg4: memref<4x8xf32, #tpu.memory_space<vmem>>, %arg5: memref<4x1xf32, #tpu.memory_space<vmem>>, %arg6: memref<1x4x256xf32, #tpu.memory_space<vmem>>, %arg7: memref<1x4x1xf32, #tpu.memory_space<vmem>>) attributes {dimension_semantics = [#tpu.dimension_semantics<parallel>], iteration_bounds = array<i64: 2>, scalar_prefetch = 0 : i64, scratch_operands = 0 : i64, tpu.core_type = #tpu.core_type<tc>, window_params = [{transform_indices = @transform_0, window_bounds = array<i64: 1, 4, 256>}, {pipeline_mode = #tpu.pipeline_mode<synchronous>, transform_indices = @transform_1, window_bounds = array<i64: 4, 8>}, {pipeline_mode = #tpu.pipeline_mode<synchronous>, transform_indices = @transform_2, window_bounds = array<i64: 1, 8>}, {pipeline_mode = #tpu.pipeline_mode<synchronous>, transform_indices = @transform_3, window_bounds = array<i64: 4, 8>}, {pipeline_mode = #tpu.pipeline_mode<synchronous>, transform_indices = @transform_4, window_bounds = array<i64: 4, 1>}, {transform_indices = @transform_5, window_bounds = array<i64: 1, 4, 256>}, {transform_indices = @transform_6, window_bounds = array<i64: 1, 4, 1>}]} {
    %c0 = arith.constant 0 : index
    %c0_0 = arith.constant 0 : index
    %c0_1 = arith.constant 0 : index
    %0 = vector.load %arg1[%c0, %c0_0, %c0_1] : memref<1x4x256xf32, #tpu.memory_space<vmem>>, vector<1x4x256xf32>
    %cst = arith.constant dense<0xFF800000> : vector<1x4xf32>
    %1 = vector.multi_reduction <maximumf>, %0, %cst [2] : vector<1x4x256xf32> to vector<1x4xf32>
    %2 = vector.shape_cast %1 : vector<1x4xf32> to vector<1x4x1xf32>
    %cst_2 = arith.constant dense<0.000000e+00> : vector<1x4xf32>
    %3 = vector.multi_reduction <add>, %0, %cst_2 [2] : vector<1x4x256xf32> to vector<1x4xf32>
    %4 = vector.shape_cast %3 : vector<1x4xf32> to vector<1x4x1xf32>
    %cst_3 = arith.constant 3.906250e-03 : f32
    %5 = vector.broadcast %cst_3 : f32 to vector<1x4x1xf32>
    %6 = arith.mulf %4, %5 : vector<1x4x1xf32>
    %c0_4 = arith.constant 0 : index
    %c0_5 = arith.constant 0 : index
    %7 = vector.load %arg2[%c0_4, %c0_5] : memref<4x8xf32, #tpu.memory_space<vmem>>, vector<4x8xf32>
    %8 = vector.shape_cast %7 : vector<4x8xf32> to vector<1x4x8xf32>
    %c0_6 = arith.constant 0 : index
    %c0_7 = arith.constant 0 : index
    %9 = vector.load %arg3[%c0_6, %c0_7] : memref<1x8xf32, #tpu.memory_space<vmem>>, vector<1x8xf32>
    %10 = vector.shape_cast %9 : vector<1x8xf32> to vector<1x1x8xf32>
    %11 = vector.broadcast %2 : vector<1x4x1xf32> to vector<1x4x8xf32>
    %12 = arith.mulf %8, %11 : vector<1x4x8xf32>
    %cst_8 = arith.constant dense<0.000000e+00> : vector<1x8xf32>
    %13 = vector.multi_reduction <add>, %12, %cst_8 [1] : vector<1x4x8xf32> to vector<1x8xf32>
    %14 = vector.shape_cast %13 : vector<1x8xf32> to vector<1x1x8xf32>
    %15 = arith.addf %14, %10 : vector<1x1x8xf32>
    %cst_9 = arith.constant 0.000000e+00 : f32
    %16 = vector.broadcast %cst_9 : f32 to vector<1x1x8xf32>
    %17 = arith.maximumf %15, %16 : vector<1x1x8xf32>
    %18 = vector.broadcast %6 : vector<1x4x1xf32> to vector<1x4x8xf32>
    %19 = arith.mulf %8, %18 : vector<1x4x8xf32>
    %cst_10 = arith.constant dense<0.000000e+00> : vector<1x8xf32>
    %20 = vector.multi_reduction <add>, %19, %cst_10 [1] : vector<1x4x8xf32> to vector<1x8xf32>
    %21 = vector.shape_cast %20 : vector<1x8xf32> to vector<1x1x8xf32>
    %22 = arith.addf %21, %10 : vector<1x1x8xf32>
    %cst_11 = arith.constant 0.000000e+00 : f32
    %23 = vector.broadcast %cst_11 : f32 to vector<1x1x8xf32>
    %24 = arith.maximumf %22, %23 : vector<1x1x8xf32>
    %c0_12 = arith.constant 0 : index
    %c0_13 = arith.constant 0 : index
    %25 = vector.load %arg4[%c0_12, %c0_13] : memref<4x8xf32, #tpu.memory_space<vmem>>, vector<4x8xf32>
    %26 = vector.shape_cast %25 : vector<4x8xf32> to vector<1x4x8xf32>
    %27 = arith.addf %17, %24 : vector<1x1x8xf32>
    %28 = vector.broadcast %27 : vector<1x1x8xf32> to vector<1x4x8xf32>
    %29 = arith.mulf %26, %28 : vector<1x4x8xf32>
    %cst_14 = arith.constant dense<0.000000e+00> : vector<1x4xf32>
    %30 = vector.multi_reduction <add>, %29, %cst_14 [2] : vector<1x4x8xf32> to vector<1x4xf32>
    %31 = vector.shape_cast %30 : vector<1x4xf32> to vector<1x4x1xf32>
    %c0_15 = arith.constant 0 : index
    %c0_16 = arith.constant 0 : index
    %32 = vector.load %arg5[%c0_15, %c0_16] : memref<4x1xf32, #tpu.memory_space<vmem>>, vector<4x1xf32>
    %33 = vector.shape_cast %32 : vector<4x1xf32> to vector<1x4x1xf32>
    %34 = arith.addf %31, %33 : vector<1x4x1xf32>
    %35 = arith.negf %34 : vector<1x4x1xf32>
    %36 = math.exp %35 : vector<1x4x1xf32>
    %cst_17 = arith.constant 1.000000e+00 : f32
    %37 = vector.broadcast %cst_17 : f32 to vector<1x4x1xf32>
    %38 = arith.addf %37, %36 : vector<1x4x1xf32>
    %39 = arith.divf %37, %38 : vector<1x4x1xf32>
    %c0_18 = arith.constant 0 : index
    %c0_19 = arith.constant 0 : index
    %c0_20 = arith.constant 0 : index
    %40 = vector.load %arg1[%c0_18, %c0_19, %c0_20] : memref<1x4x256xf32, #tpu.memory_space<vmem>>, vector<1x4x256xf32>
    %41 = vector.broadcast %39 : vector<1x4x1xf32> to vector<1x4x256xf32>
    %42 = arith.mulf %40, %41 : vector<1x4x256xf32>
    %c0_21 = arith.constant 0 : index
    %c0_22 = arith.constant 0 : index
    %c0_23 = arith.constant 0 : index
    %43 = vector.load %arg6[%c0_21, %c0_22, %c0_23] : memref<1x4x256xf32, #tpu.memory_space<vmem>>, vector<1x4x256xf32>
    tpu.vector_store %arg6[%c0_21, %c0_22, %c0_23], %42 {strides = array<i32>} : memref<1x4x256xf32, #tpu.memory_space<vmem>>, vector<1x4x256xf32>,
    %c0_24 = arith.constant 0 : index
    %c0_25 = arith.constant 0 : index
    %c0_26 = arith.constant 0 : index
    %44 = vector.load %arg7[%c0_24, %c0_25, %c0_26] : memref<1x4x1xf32, #tpu.memory_space<vmem>>, vector<1x4x1xf32>
    tpu.vector_store %arg7[%c0_24, %c0_25, %c0_26], %39 {strides = array<i32>} : memref<1x4x1xf32, #tpu.memory_space<vmem>>, vector<1x4x1xf32>,
    return
  }
  func.func @transform_0(%arg0: i32) -> (i32, i32, i32) {
    %c0_i32 = arith.constant 0 : i32
    %c0_i32_0 = arith.constant 0 : i32
    %c0_i32_1 = arith.constant 0 : i32
    return %arg0, %c0_i32, %c0_i32_0 : i32, i32, i32
  }
  func.func @transform_1(%arg0: i32) -> (i32, i32) {
    %c0_i32 = arith.constant 0 : i32
    %c0_i32_0 = arith.constant 0 : i32
    %c0_i32_1 = arith.constant 0 : i32
    return %c0_i32, %c0_i32_0 : i32, i32
  }
  func.func @transform_2(%arg0: i32) -> (i32, i32) {
    %c0_i32 = arith.constant 0 : i32
    %c0_i32_0 = arith.constant 0 : i32
    %c0_i32_1 = arith.constant 0 : i32
    return %c0_i32, %c0_i32_0 : i32, i32
  }
  func.func @transform_3(%arg0: i32) -> (i32, i32) {
    %c0_i32 = arith.constant 0 : i32
    %c0_i32_0 = arith.constant 0 : i32
    %c0_i32_1 = arith.constant 0 : i32
    return %c0_i32, %c0_i32_0 : i32, i32
  }
  func.func @transform_4(%arg0: i32) -> (i32, i32) {
    %c0_i32 = arith.constant 0 : i32
    %c0_i32_0 = arith.constant 0 : i32
    %c0_i32_1 = arith.constant 0 : i32
    return %c0_i32, %c0_i32_0 : i32, i32
  }
  func.func @transform_5(%arg0: i32) -> (i32, i32, i32) {
    %c0_i32 = arith.constant 0 : i32
    %c0_i32_0 = arith.constant 0 : i32
    %c0_i32_1 = arith.constant 0 : i32
    return %arg0, %c0_i32, %c0_i32_0 : i32, i32, i32
  }
  func.func @transform_6(%arg0: i32) -> (i32, i32, i32) {
    %c0_i32 = arith.constant 0 : i32
    %c0_i32_0 = arith.constant 0 : i32
    %c0_i32_1 = arith.constant 0 : i32
    return %arg0, %c0_i32, %c0_i32_0 : i32, i32, i32
  }
}

</mosaic_0001>

<llo_original>
// kernel: tpu_custom_call.1
$region0: #{tpu_custom_call.1}
  #allocation0 [shape = 'u32[]', space=smem, size = 0x4, offset = 0x4, fixed_abs, tag = 'smem constant byte address 0x4 - core index']
  #allocation1 [shape = 'u32[72,128]{1,0:T(1,128)}', space=vmem, size = 0x9000, scoped, tag = 'internal scratch']
  %s0 = inlined_call_operand.hbm [shape: f32[2,4,256], index: 0, kind: input, shape index: {}]
  %s1 = inlined_call_operand.vmem [shape: f32[4,8], index: 1, kind: input, shape index: {}]
  %s2 = inlined_call_operand.vmem [shape: f32[1,8], index: 2, kind: input, shape index: {}]
  %s3 = inlined_call_operand.hbm [shape: f32[4,8], index: 3, kind: input, shape index: {}]
  %s4 = inlined_call_operand.vmem [shape: f32[4,1], index: 4, kind: input, shape index: {}]
  %s5 = inlined_call_operand.hbm [shape: f32[2,4,256], index: 5, kind: output, shape index: {0}]
  %s6 = inlined_call_operand.vmem [shape: f32[2,4,1], index: 6, kind: output, shape index: {1}]
  %7 = xla_tuple %s5, %s6
  %s8 = sld [smem:[#allocation0]]
  $region69: #{tpu_custom_call.1} parent=0
    _
  %s10 = ssub.s32 1, %s8
  %s11 = scalar_select 0, %s10, %s8
  $region1: #{tpu_custom_call.1} parent=0
    #allocation2 [shape = 'u8[8192]{0}', space=vmem, size = 0x2000, scoped, tag = 'input window, operand 0']
    #allocation3 [shape = 's32[2]{0}', space=sflag, size = 0x8, scoped, tag = 'scoped memory for tpu_custom_call.1']
    #allocation4 [shape = 's32[2]{0}', space=sflag, size = 0x8, scoped, tag = 'scoped memory for tpu_custom_call.1']
    #allocation5 [shape = 'u8[2048]{0}', space=vmem, size = 0x800, scoped, tag = 'input window, operand 3, single buffered']
    #allocation6 [shape = 's32[1]{0}', space=sflag, size = 0x4, scoped, tag = 'scoped memory for tpu_custom_call.1']
    #allocation7 [shape = 'u8[8192]{0}', space=vmem, size = 0x2000, scoped, tag = 'output window, operand 0']
    %12 = vsyncpa [#allocation3], 0
    %s13 = scalar_lea.sflag [#allocation3], 1
    %14 = vsyncpa %s13, 0
    %15 = vsyncpa [#allocation6], 0
    %16 = vsyncpa [#allocation4], 0
    %s17 = scalar_lea.sflag [#allocation4], 1
    %18 = vsyncpa %s17, 0
    loop: start=0, step=1, limit=4
    $region2: #{tpu_custom_call.1} parent=1 // loop_pre_header
      _
    $region3: #{tpu_custom_call.1} parent=1 // loop_header
      %s20 = sphi 0, %s24
      %p21 = scmp.ge.s32.totalorder %s20, 4
      %s30 = sphi 0, %s32
      %s33 = sphi 0, %s30
      %s34 = sphi 0, %s33
      %s50 = sphi 0, %s34
      %s54 = sphi 0, %s54
      %s56 = sphi 0, %s54
      %s57 = sphi 0, %s56
      %s71 = sphi 0, %s57
      %s75 = sphi 0, %s75
      %s77 = sphi 0, %s75
      %s78 = sphi 0, %s77
      %s92 = sphi 0, %s78
      %s96 = sphi 0, %s96
      %s98 = sphi 0, %s96
      %s99 = sphi 0, %s98
      %s113 = sphi 0, %s99
      %s117 = sphi 0, %s117
      %s119 = sphi 0, %s117
      %s120 = sphi 0, %s119
      %s134 = sphi 0, %s120
      %s140 = sphi 0, %s142
      %s143 = sphi 0, %s140
      %s144 = sphi 0, %s143
      %s160 = sphi 0, %s144
      %s166 = sphi 0, %s168
      %s169 = sphi 0, %s166
      %s170 = sphi 0, %s169
      %s186 = sphi 0, %s170
    $region4: #{tpu_custom_call.1} parent=1 // loop_header_branch
      %23 = sbr.rel (%p21) target = $region8
    $region5: #{tpu_custom_call.1} parent=1 // loop_body
      %s25 = ssub.s32 %s20, 1
      %s26 = ssub.s32 %s20, 2
      %s27 = sadd.s32 %s20, 1
      %s28 = ssub.s32 %s20, %s27
      %p29 = scmp.eq.s32.totalorder %s28, 0
      %s31 = sadd.s32 %s30, 1
      %s32 = scalar_select %p29, %s30, %s31
      %p35 = pneg %p29
      %p36 = scmp.eq.s32.totalorder %s20, 1
      %p37 = por %p35, %p36
      %p38 = scmp.ne.s32.totalorder %s30, %s33
      %p39 = scmp.eq.s32.totalorder %s20, 0
      %p40 = por %p38, %p39
      %p41 = scmp.ne.s32.totalorder %s30, %s33
      %p42 = scmp.eq.s32.totalorder %s25, 1
      %p43 = por %p41, %p42
      %p44 = scmp.ne.s32.totalorder %s33, %s34
      %p45 = scmp.eq.s32.totalorder %s25, 0
      %p46 = por %p44, %p45
      %p47 = scmp.ne.s32.totalorder %s33, %s34
      %p48 = scmp.eq.s32.totalorder %s26, 1
      %p49 = por %p47, %p48
      %p51 = scmp.ne.s32.totalorder %s34, %s50
      %p52 = scmp.eq.s32.totalorder %s26, 0
      %p53 = por %p51, %p52
      %s55 = sadd.s32 %s54, 1
      %p58 = scmp.eq.s32.totalorder %s20, 1
      %p59 = scmp.ne.s32.totalorder %s54, %s56
      %p60 = scmp.eq.s32.totalorder %s20, 0
      %p61 = por %p59, %p60
      %p62 = scmp.ne.s32.totalorder %s54, %s56
      %p63 = scmp.eq.s32.totalorder %s25, 1
      %p64 = por %p62, %p63
      %p65 = scmp.ne.s32.totalorder %s56, %s57
      %p66 = scmp.eq.s32.totalorder %s25, 0
      %p67 = por %p65, %p66
      %p68 = scmp.ne.s32.totalorder %s56, %s57
      %p69 = scmp.eq.s32.totalorder %s26, 1
      %p70 = por %p68, %p69
      %p72 = scmp.ne.s32.totalorder %s57, %s71
      %p73 = scmp.eq.s32.totalorder %s26, 0
      %p74 = por %p72, %p73
      %s76 = sadd.s32 %s75, 1
      %p79 = scmp.eq.s32.totalorder %s20, 1
      %p80 = scmp.ne.s32.totalorder %s75, %s77
      %p81 = scmp.eq.s32.totalorder %s20, 0
      %p82 = por %p80, %p81
      %p83 = scmp.ne.s32.totalorder %s75, %s77
      %p84 = scmp.eq.s32.totalorder %s25, 1
      %p85 = por %p83, %p84
      %p86 = scmp.ne.s32.totalorder %s77, %s78
      %p87 = scmp.eq.s32.totalorder %s25, 0
      %p88 = por %p86, %p87
      %p89 = scmp.ne.s32.totalorder %s77, %s78
      %p90 = scmp.eq.s32.totalorder %s26, 1
      %p91 = por %p89, %p90
      %p93 = scmp.ne.s32.totalorder %s78, %s92
      %p94 = scmp.eq.s32.totalorder %s26, 0
      %p95 = por %p93, %p94
      %s97 = sadd.s32 %s96, 1
      %p100 = scmp.eq.s32.totalorder %s20, 1
      %p101 = scmp.ne.s32.totalorder %s96, %s98
      %p102 = scmp.eq.s32.totalorder %s20, 0
      %p103 = por %p101, %p102
      %p104 = scmp.ne.s32.totalorder %s96, %s98
      %p105 = scmp.eq.s32.totalorder %s25, 1
      %p106 = por %p104, %p105
      %p107 = scmp.ne.s32.totalorder %s98, %s99
      %p108 = scmp.eq.s32.totalorder %s25, 0
      %p109 = por %p107, %p108
      %p110 = scmp.ne.s32.totalorder %s98, %s99
      %p111 = scmp.eq.s32.totalorder %s26, 1
      %p112 = por %p110, %p111
      %p114 = scmp.ne.s32.totalorder %s99, %s113
      %p115 = scmp.eq.s32.totalorder %s26, 0
      %p116 = por %p114, %p115
      %s118 = sadd.s32 %s117, 1
      %p121 = scmp.eq.s32.totalorder %s20, 1
      %p122 = scmp.ne.s32.totalorder %s117, %s119
      %p123 = scmp.eq.s32.totalorder %s20, 0
      %p124 = por %p122, %p123
      %p125 = scmp.ne.s32.totalorder %s117, %s119
      %p126 = scmp.eq.s32.totalorder %s25, 1
      %p127 = por %p125, %p126
      %p128 = scmp.ne.s32.totalorder %s119, %s120
      %p129 = scmp.eq.s32.totalorder %s25, 0
      %p130 = por %p128, %p129
      %p131 = scmp.ne.s32.totalorder %s119, %s120
      %p132 = scmp.eq.s32.totalorder %s26, 1
      %p133 = por %p131, %p132
      %p135 = scmp.ne.s32.totalorder %s120, %s134
      %p136 = scmp.eq.s32.totalorder %s26, 0
      %p137 = por %p135, %p136
      %s138 = ssub.s32 %s20, %s27
      %p139 = scmp.eq.s32.totalorder %s138, 0
      %s141 = sadd.s32 %s140, 1
      %s142 = scalar_select %p139, %s140, %s141
      %p145 = pneg %p139
      %p146 = scmp.eq.s32.totalorder %s20, 1
      %p147 = por %p145, %p146
      %p148 = scmp.ne.s32.totalorder %s140, %s143
      %p149 = scmp.eq.s32.totalorder %s20, 0
      %p150 = por %p148, %p149
      %p151 = scmp.ne.s32.totalorder %s140, %s143
      %p152 = scmp.eq.s32.totalorder %s25, 1
      %p153 = por %p151, %p152
      %p154 = scmp.ne.s32.totalorder %s143, %s144
      %p155 = scmp.eq.s32.totalorder %s25, 0
      %p156 = por %p154, %p155
      %p157 = scmp.ne.s32.totalorder %s143, %s144
      %p158 = scmp.eq.s32.totalorder %s26, 1
      %p159 = por %p157, %p158
      %p161 = scmp.ne.s32.totalorder %s144, %s160
      %p162 = scmp.eq.s32.totalorder %s26, 0
      %p163 = por %p161, %p162
      %s164 = ssub.s32 %s20, %s27
      %p165 = scmp.eq.s32.totalorder %s164, 0
      %s167 = sadd.s32 %s166, 1
      %s168 = scalar_select %p165, %s166, %s167
      %p171 = pneg %p165
      %p172 = scmp.eq.s32.totalorder %s20, 1
      %p173 = por %p171, %p172
      %p174 = scmp.ne.s32.totalorder %s166, %s169
      %p175 = scmp.eq.s32.totalorder %s20, 0
      %p176 = por %p174, %p175
      %p177 = scmp.ne.s32.totalorder %s166, %s169
      %p178 = scmp.eq.s32.totalorder %s25, 1
      %p179 = por %p177, %p178
      %p180 = scmp.ne.s32.totalorder %s169, %s170
      %p181 = scmp.eq.s32.totalorder %s25, 0
      %p182 = por %p180, %p181
      %p183 = scmp.ne.s32.totalorder %s169, %s170
      %p184 = scmp.eq.s32.totalorder %s26, 1
      %p185 = por %p183, %p184
      %p187 = scmp.ne.s32.totalorder %s170, %s186
      %p188 = scmp.eq.s32.totalorder %s26, 0
      %p189 = por %p187, %p188
      %p190 = scmp.le.s32.totalorder 1, %s20
      %p191 = scmp.lt.s32.totalorder %s20, 3
      %p192 = pnand %p190, %p191
      %p193 = pneg %p192
      // Predicated region
      $region9: #{tpu_custom_call.1} parent=5 // pred_check
        _
      $region10: #{tpu_custom_call.1} parent=5 // pred_check_branch
        %195 = sbr.rel (%p192) target = $region12
      $region11: #{tpu_custom_call.1} parent=5 // pred_region
        %s196 = ssub.s32 %s20, 1
        // Predicated region
        $region13: #{tpu_custom_call.1} parent=11 // pred_check
          %p197 = pneg %p67
        $region14: #{tpu_custom_call.1} parent=11 // pred_check_branch
          %199 = sbr.rel (%p197) target = $region16
        $region15: #{tpu_custom_call.1} parent=11 // pred_region
          _
        $region16: #{tpu_custom_call.1} parent=11 // pred_fallthru
          _
        // Predicated region
        $region17: #{tpu_custom_call.1} parent=11 // pred_check
          %p200 = pneg %p88
        $region18: #{tpu_custom_call.1} parent=11 // pred_check_branch
          %202 = sbr.rel (%p200) target = $region20
        $region19: #{tpu_custom_call.1} parent=11 // pred_region
          _
        $region20: #{tpu_custom_call.1} parent=11 // pred_fallthru
          _
        // Predicated region
        $region21: #{tpu_custom_call.1} parent=11 // pred_check
          %p203 = pneg %p109
        $region22: #{tpu_custom_call.1} parent=11 // pred_check_branch
          %205 = sbr.rel (%p203) target = $region24
        $region23: #{tpu_custom_call.1} parent=11 // pred_region
          %207 = vsyncadd [#allocation6], 0
          %s209 = sshll.u32 %s3, 4
          %s210 = int_to_ptr.hbm [resolvable:$true] %s209
          %s211 = sshll.u32 [#allocation5], 4
          %s212 = int_to_ptr.vmem [resolvable:$true] %s211
          %214 = dma.hbm_to_vmem [thread:$0]  %s210, 64, %s212, [#allocation6]
        $region24: #{tpu_custom_call.1} parent=11 // pred_fallthru
          _
        // Predicated region
        $region25: #{tpu_custom_call.1} parent=11 // pred_check
          %p215 = pneg %p130
        $region26: #{tpu_custom_call.1} parent=11 // pred_check_branch
          %217 = sbr.rel (%p215) target = $region28
        $region27: #{tpu_custom_call.1} parent=11 // pred_region
          _
        $region28: #{tpu_custom_call.1} parent=11 // pred_fallthru
          _
      $region12: #{tpu_custom_call.1} parent=5 // pred_fallthru
        _
      %p218 = scmp.lt.s32.totalorder %s20, 2
      // Predicated region
      $region29: #{tpu_custom_call.1} parent=5 // pred_check
        %p219 = pneg %p218
      $region30: #{tpu_custom_call.1} parent=5 // pred_check_branch
        %221 = sbr.rel (%p219) target = $region32
      $region31: #{tpu_custom_call.1} parent=5 // pred_region
        // Predicated region
        $region33: #{tpu_custom_call.1} parent=31 // pred_check
          %p222 = pneg %p40
        $region34: #{tpu_custom_call.1} parent=31 // pred_check_branch
          %224 = sbr.rel (%p222) target = $region36
        $region35: #{tpu_custom_call.1} parent=31 // pred_region
          %s225 = sand.u32 %s30, 1
          %s226 = scalar_lea.sflag [#allocation3], %s225
          %s227 = sand.u32 %s30, 1
          %s228 = smul.addr %s227, 8
          %s229 = scalar_lea.vmem [#allocation2], %s228
          %231 = vsyncadd %s226, 0
          %s232 = smul.addr %s20, 2
          %s233 = smul.addr %s232, 4
          %s234 = scalar_lea.hbm %s0, %s233
          %s236 = sshll.u32 %s234, 4
          %s237 = int_to_ptr.hbm [resolvable:$true] %s236
          %s238 = sshll.u32 %s229, 4
          %s239 = int_to_ptr.vmem [resolvable:$true] %s238
          %241 = dma.hbm_to_vmem [thread:$0]  %s237, 128, %s239, %s226
        $region36: #{tpu_custom_call.1} parent=31 // pred_fallthru
          _
      $region32: #{tpu_custom_call.1} parent=5 // pred_fallthru
        _
      %p242 = scmp.le.s32.totalorder 1, %s20
      %p243 = scmp.lt.s32.totalorder %s20, 3
      %p244 = pnand %p242, %p243
      %p245 = pneg %p244
      // Predicated region
      $region37: #{tpu_custom_call.1} parent=5 // pred_check
        _
      $region38: #{tpu_custom_call.1} parent=5 // pred_check_branch
        %247 = sbr.rel (%p244) target = $region40
      $region39: #{tpu_custom_call.1} parent=5 // pred_region
        %s248 = ssub.s32 %s20, 1
        %s249 = sand.u32 %s33, 1
        %s250 = scalar_lea.sflag [#allocation3], %s249
        %s251 = sand.u32 %s33, 1
        %s252 = smul.addr %s251, 8
        %s253 = scalar_lea.vmem [#allocation2], %s252
        // Predicated region
        $region41: #{tpu_custom_call.1} parent=39 // pred_check
          %p254 = pneg %p46
        $region42: #{tpu_custom_call.1} parent=39 // pred_check_branch
          %256 = sbr.rel (%p254) target = $region44
        $region43: #{tpu_custom_call.1} parent=39 // pred_region
          %258 = dma.done %s250, 128
        $region44: #{tpu_custom_call.1} parent=39 // pred_fallthru
          _
        // Predicated region
        $region45: #{tpu_custom_call.1} parent=39 // pred_check
          %p259 = pneg %p109
        $region46: #{tpu_custom_call.1} parent=39 // pred_check_branch
          %261 = sbr.rel (%p259) target = $region48
        $region47: #{tpu_custom_call.1} parent=39 // pred_region
          %263 = dma.done [#allocation6], 64
        $region48: #{tpu_custom_call.1} parent=39 // pred_fallthru
          _
        %s264 = sand.u32 %s33, 1
        %s265 = scalar_lea.sflag [#allocation3], %s264
        %s266 = sand.u32 %s33, 1
        %s267 = smul.addr %s266, 8
        %s268 = scalar_lea.vmem [#allocation2], %s267
        %p269 = pneg %p46
        %p270 = pneg %p43
        %p271 = pneg %p67
        %p272 = pneg %p64
        %p273 = pneg %p88
        %p274 = pneg %p85
        %p275 = pneg %p109
        %p276 = pneg %p106
        %p277 = pneg %p130
        %p278 = pneg %p127
        %p279 = pneg %p156
        %p280 = pneg %p153
        %s281 = sand.u32 %s143, 1
        %s282 = scalar_lea.sflag [#allocation4], %s281
        %s283 = sand.u32 %s143, 1
        %s284 = smul.addr %s283, 8
        %s285 = scalar_lea.vmem [#allocation7], %s284
        %p286 = pneg %p182
        %p287 = pneg %p179
        %p288 = scmp.lt.s32.totalorder %s25, 1
        %s289 = scalar_select %p288, %s25, 1
        %s290 = smul.addr %s289, 4
        %s291 = scalar_lea.vmem %s6, %s290
        %p292 = scmp.lt.s32.totalorder %s25, 1
        %s293 = scalar_select %p292, %s25, 1
        %s294 = smul.addr %s293, 4
        %s295 = scalar_lea.vmem %s6, %s294
        %v296 = vld [vmem:[%s253] sm:$0xff]
        %298 = vst [vmem:[#allocation1] ss:$2 sm:$0xff] %v296
        %v299 = vld.sshfl [vmem:[#allocation1] sm:$0xff pattern:$0x75316420]
        %v300 = vld.sshfl [vmem:[#allocation1 + $0x8] sm:$0xff pattern:$0x75316420]
        %vm303 = vcmask 1043456
        %v304 = vsel %vm303, %v299, -inf
        %v305 = vsel %vm303, %v300, -inf
        %v306 = vmax.f32 %v304, %v305
        %307 = vmax.xlane.f32.xlu0 %v306
        %v308 = vpop.xlane.xlu0 %307
        %309 = vst [vmem:[#allocation1] ss:$2 sm:$0xff] %v296
        %v310 = vld.sshfl [vmem:[#allocation1] sm:$0xff pattern:$0x75316420]
        %v311 = vld.sshfl [vmem:[#allocation1 + $0x8] sm:$0xff pattern:$0x75316420]
        %v314 = vsel %vm303, %v310, 0.0
        %v315 = vsel %vm303, %v311, 0.0
        %v316 = vadd.f32 %v314, %v315
        %317 = vadd.xlane.f32.xlu0 %v316
        %v318 = vpop.xlane.xlu0 %317
        %v319 = vmul.f32 %v318, 0.00390625
        %v320 = vld [vmem:[%s1] sm:$0xf]
        %v321 = vld [vmem:[%s2] sm:$0x1]
        %v322 = vmul.f32 %v320, %v308
        %vm323 = vcmask 60416
        %v324 = vsel %vm323, %v322, 0.0
        %v325 = vrot.slane %v324, 4
        %v326 = vadd.f32 %v324, %v325
        %v327 = vrot.slane %v326, 2
        %v328 = vadd.f32 %v326, %v327
        %v329 = vrot.slane %v328, 1
        %v330 = vadd.f32 %v328, %v329
        %v331 = vadd.f32 %v330, %v321
        %v332 = vmax.f32 %v331, 0.0
        %v333 = vmul.f32 %v320, %v319
        %v334 = vsel %vm323, %v333, 0.0
        %v335 = vrot.slane %v334, 4
        %v336 = vadd.f32 %v334, %v335
        %v337 = vrot.slane %v336, 2
        %v338 = vadd.f32 %v336, %v337
        %v339 = vrot.slane %v338, 1
        %v340 = vadd.f32 %v338, %v339
        %v341 = vadd.f32 %v340, %v321
        %v342 = vmax.f32 %v341, 0.0
        %v343 = vld [vmem:[#allocation5] sm:$0xf]
        %v344 = vadd.f32 %v332, %v342
        %v345 = vperm.slane %v344, 0
        %v346 = vmul.f32 %v343, %v345
        %v347 = vsel %vm323, %v346, 0.0
        %348 = vadd.xlane.f32.xlu0 %v347
        %v349 = vpop.xlane.xlu0 %348
        %v350 = vld [vmem:[%s4] sm:$0xf]
        %v351 = vadd.f32 %v349, %v350
        %v352 = vxor.u32 %v351, 2147483648
        %v353 = vmul.f32 %v352, 1.442695
        %v354 = vpow.pop %v353
        %v355 = vadd.f32 %v354, 1.0
        %v356 = vrcp.pop %v355
        %v357 = vmul.f32 %v355, %v356
        %v358 = vsub.f32 1.0, %v357
        %v359 = vmul.f32 %v356, %v358
        %v360 = vadd.f32 %v356, %v359
        %vm361 = vweird.f32 %v355
        %vm362 = vweird.f32 %v356
        %vm363 = vmor %vm361, %vm362
        %v364 = vsel %vm363, %v356, %v360
        %v365 = vand.u32 2147483647, %v355
        %vm366 = vcmp.eq.f32.partialorder %v365, 8.507059e+37
        %v367 = vand.u32 %v355, 2147483648
        %v368 = vor.u32 1.1754944e-38, %v367
        %v369 = vsel %vm366, %v368, %v364
        %v370 = vmul.f32 1.0, %v369
        %372 = vset.pattern.permute.xlu0 0
        %373 = vperm.xlu0 %372, %v370
        %v374 = vpop.permute.xlu0 %373
        %v376 = vunpack.c.l.s4 839922192
        %v377 = vunpack.c.0.s8 %v376
        %v378 = vperm.slane %v374, %v377
        %v380 = vmul.f32 %v296, %v378
        %381 = vst [vmem:[%s285] sm:$0xff] %v380
        %vm382 = vcmask 3072
        %383 = vst.msk [vmem:[%s295] sm:$0xf] %vm382, %v370
        %s384 = sand.u32 %s143, 1
        %s385 = scalar_lea.sflag [#allocation4], %s384
        %s386 = sand.u32 %s143, 1
        %s387 = smul.addr %s386, 8
        %s388 = scalar_lea.vmem [#allocation7], %s387
        %p389 = scmp.lt.s32.totalorder %s25, 1
        %s390 = scalar_select %p389, %s25, 1
        %s391 = smul.addr %s390, 4
        %s392 = scalar_lea.vmem %s6, %s391
        // Predicated region
        $region49: #{tpu_custom_call.1} parent=39 // pred_check
          %p393 = pneg %p153
        $region50: #{tpu_custom_call.1} parent=39 // pred_check_branch
          %395 = sbr.rel (%p393) target = $region52
        $region51: #{tpu_custom_call.1} parent=39 // pred_region
          %397 = vsyncadd %s385, 0
          %s398 = smul.addr %s25, 2
          %s399 = smul.addr %s398, 4
          %s400 = scalar_lea.hbm %s5, %s399
          %s402 = sshll.u32 %s388, 4
          %s403 = int_to_ptr.vmem [resolvable:$true] %s402
          %s404 = sshll.u32 %s400, 4
          %s405 = int_to_ptr.hbm [resolvable:$true] %s404
          %407 = dma.vmem_to_hbm [thread:$0]  %s403, 128, %s405, %s385
        $region52: #{tpu_custom_call.1} parent=39 // pred_fallthru
          _
        // Predicated region
        $region53: #{tpu_custom_call.1} parent=39 // pred_check
          %p408 = pneg %p179
        $region54: #{tpu_custom_call.1} parent=39 // pred_check_branch
          %410 = sbr.rel (%p408) target = $region56
        $region55: #{tpu_custom_call.1} parent=39 // pred_region
          _
        $region56: #{tpu_custom_call.1} parent=39 // pred_fallthru
          _
      $region40: #{tpu_custom_call.1} parent=5 // pred_fallthru
        _
      %p411 = scmp.le.s32.totalorder 2, %s20
      // Predicated region
      $region57: #{tpu_custom_call.1} parent=5 // pred_check
        %p412 = pneg %p411
      $region58: #{tpu_custom_call.1} parent=5 // pred_check_branch
        %414 = sbr.rel (%p412) target = $region60
      $region59: #{tpu_custom_call.1} parent=5 // pred_region
        %s415 = ssub.s32 %s20, 2
        // Predicated region
        $region61: #{tpu_custom_call.1} parent=59 // pred_check
          %p416 = pneg %p159
        $region62: #{tpu_custom_call.1} parent=59 // pred_check_branch
          %418 = sbr.rel (%p416) target = $region64
        $region63: #{tpu_custom_call.1} parent=59 // pred_region
          %s419 = sand.u32 %s144, 1
          %s420 = scalar_lea.sflag [#allocation4], %s419
          %s421 = sand.u32 %s144, 1
          %s422 = smul.addr %s421, 8
          %s423 = scalar_lea.vmem [#allocation7], %s422
          %425 = dma.done %s420, 128
        $region64: #{tpu_custom_call.1} parent=59 // pred_fallthru
          _
        // Predicated region
        $region65: #{tpu_custom_call.1} parent=59 // pred_check
          %p426 = pneg %p185
        $region66: #{tpu_custom_call.1} parent=59 // pred_check_branch
          %428 = sbr.rel (%p426) target = $region68
        $region67: #{tpu_custom_call.1} parent=59 // pred_region
          %p429 = scmp.lt.s32.totalorder %s26, 1
          %s430 = scalar_select %p429, %s26, 1
          %s431 = smul.addr %s430, 4
          %s432 = scalar_lea.vmem %s6, %s431
        $region68: #{tpu_custom_call.1} parent=59 // pred_fallthru
          _
      $region60: #{tpu_custom_call.1} parent=5 // pred_fallthru
        _
    $region6: #{tpu_custom_call.1} parent=1 // loop_footer
      %s24 = sadd.s32 1, %s20
    $region7: #{tpu_custom_call.1} parent=1 // loop_footer_branch
      %19 = sbr.rel target = $region3
    $region8: #{tpu_custom_call.1} parent=1 // loop_exit
      _
    %433 = vsyncpa [#allocation3], 1
    %s434 = scalar_lea.sflag [#allocation3], 1
    %435 = vsyncpa %s434, 1
    %436 = vsyncpa [#allocation6], 1
    %437 = vsyncpa [#allocation4], 1
    %s438 = scalar_lea.sflag [#allocation4], 1
    %439 = vsyncpa %s438, 1

</llo_original>
